<compile_context>
chip_gen: v6e
topology: v6e:2x2x1
jax: 0.10.0
libtpu: 0.0.40
codegen_flags: <defaults>
</compile_context>

<pallas_src>
import functools

import jax
import jax.numpy as jnp
from jax.experimental import pallas as pl
from jax.experimental.pallas import tpu as pltpu


def _cls_kernel(x_ref, w1_ref, b1_ref, w2_ref, b2_ref, o_ref):
    # Linear_1: (TB, D) bf16 @ (D, 128) bf16 -> f32 accumulate on the MXU.
    h = jnp.dot(x_ref[...], w1_ref[...], preferred_element_type=jnp.float32)
    h = h + b1_ref[...]                                            # (TB, 128) f32
    # Dropout: module default p=0 (and eval mode) -> identity.
    # TODO(synk): training-mode dropout (p>0) would need pltpu.prng_seed +
    # pltpu.prng_random_bits masking; omitted since forward semantics here are identity.
    # Linear_2 (128 -> 1): VPU multiply + lane (XLU) reduction instead of a
    # badly shaped N=1 MXU matmul (1/128 of MXU output width).
    logits = jnp.sum(h * w2_ref[...], axis=-1, keepdims=True) + b2_ref[...]  # (TB, 1)
    # Sigmoid via EUP exp + approximate reciprocal (vrcp) -> stays off the VALU.
    o_ref[...] = pl.reciprocal(1.0 + jnp.exp(-logits), approx=True)


@functools.partial(jax.jit, static_argnames=("block_b",))
def classification_layer(x, params, *, block_b=512):
    """Forward of ClassificationLayer_1: sigmoid((x @ w1 + b1) @ w2.T + b2).

    x: (B, D) float.  params: w1 (D,128), b1 (1,128), w2 (1,128), b2 (1,1).
    Returns (B, 1) float32.

    block_b is the batch tile: 512 fits comfortably in every generation's scoped
    VMEM (v5e 16 MiB default, v6e/v7x 32 MiB); sweep up to 1024-2048 on v6e for
    large D if desired.
    """
    B, D = x.shape
    n_tiles = pl.cdiv(B, block_b)
    b_pad = n_tiles * block_b

    # bf16 halves HBM traffic on the dominant stream (x); pad batch to whole tiles.
    x_bf16 = x.astype(jnp.bfloat16)
    if b_pad != B:
        x_bf16 = jnp.pad(x_bf16, ((0, b_pad - B), (0, 0)))
    w1 = params["w1"].astype(jnp.bfloat16)
    b1 = params["b1"].astype(jnp.float32)
    w2 = params["w2"].astype(jnp.float32)
    b2 = params["b2"].astype(jnp.float32)

    out = pl.pallas_call(
        _cls_kernel,
        out_shape=jax.ShapeDtypeStruct((b_pad, 1), jnp.float32),
        grid_spec=pltpu.PrefetchScalarGridSpec(
            num_scalar_prefetch=0,
            grid=(n_tiles,),
            in_specs=[
                pl.BlockSpec((block_b, D), lambda i: (i, 0)),  # x tile: streamed/pipelined
                pl.BlockSpec((D, 128), lambda i: (0, 0)),      # w1: VMEM-resident
                pl.BlockSpec((1, 128), lambda i: (0, 0)),      # b1: VMEM-resident
                pl.BlockSpec((1, 128), lambda i: (0, 0)),      # w2 row: VMEM-resident
                pl.BlockSpec((1, 1), lambda i: (0, 0)),        # b2: VMEM-resident
            ],
            out_specs=pl.BlockSpec((block_b, 1), lambda i: (i, 0)),
        ),
        compiler_params=pltpu.CompilerParams(
            # Batch tiles are independent -> shard across TensorCores on v7x
            # (no-op on single-TC v5e/v6e).
            dimension_semantics=("parallel",),
            vmem_limit_bytes=32 * 1024 * 1024,
        ),
    )(x_bf16, w1, b1, w2, b2)
    return out[:B]


def init_params(key, dim):
    """Deterministic init mimicking torch.nn.Linear default U(-1/sqrt(fan_in), ...)."""
    ks = jax.random.split(key, 4)
    bound1 = 1.0 / jnp.sqrt(dim)
    w1 = jax.random.uniform(ks[0], (dim, 128), jnp.float32, -bound1, bound1)
    b1 = jax.random.uniform(ks[1], (1, 128), jnp.float32, -bound1, bound1)
    bound2 = 1.0 / jnp.sqrt(128.0)
    w2 = jax.random.uniform(ks[2], (1, 128), jnp.float32, -bound2, bound2)  # PyTorch (1,128) weight as a row
    b2 = jax.random.uniform(ks[3], (1, 1), jnp.float32, -bound2, bound2)
    return dict(w1=w1, b1=b1, w2=w2, b2=b2)


if __name__ == "__main__":
    key = jax.random.PRNGKey(0)
    kx, kp = jax.random.split(key)
    B, D = 8, 32  # small batch, input feature dim
    x = jax.random.normal(kx, (B, D), jnp.float32)
    params = init_params(kp, D)

    out = classification_layer(x, params)
    out = jax.block_until_ready(out)

    # Pure-JAX f32 reference: sigmoid((x @ w1 + b1) @ w2.T + b2)
    h = x @ params["w1"] + params["b1"]
    ref = jax.nn.sigmoid(h @ params["w2"].T + params["b2"])

    assert out.shape == (B, 1)
    # bf16 matmul inputs + approx reciprocal -> compare with a loose tolerance.
    assert jnp.allclose(out, ref, atol=2e-2, rtol=2e-2), (out, ref)

    print("KERNEL_OK")
</pallas_src>

<mosaic_0001>
module attributes {stable_mosaic.version = 11 : i64} {
  func.func @_cls_kernel(%arg0: i32, %arg1: memref<512x32xbf16, #tpu.memory_space<vmem>>, %arg2: memref<32x128xbf16, #tpu.memory_space<vmem>>, %arg3: memref<1x128xf32, #tpu.memory_space<vmem>>, %arg4: memref<1x128xf32, #tpu.memory_space<vmem>>, %arg5: memref<1x1xf32, #tpu.memory_space<vmem>>, %arg6: memref<512x1xf32, #tpu.memory_space<vmem>>) attributes {dimension_semantics = [#tpu.dimension_semantics<parallel>], iteration_bounds = array<i64: 1>, scalar_prefetch = 0 : i64, scratch_operands = 0 : i64, tpu.core_type = #tpu.core_type<tc>, window_params = [{transform_indices = @transform_0, window_bounds = array<i64: 512, 32>}, {pipeline_mode = #tpu.pipeline_mode<synchronous>, transform_indices = @transform_1, window_bounds = array<i64: 32, 128>}, {pipeline_mode = #tpu.pipeline_mode<synchronous>, transform_indices = @transform_2, window_bounds = array<i64: 1, 128>}, {pipeline_mode = #tpu.pipeline_mode<synchronous>, transform_indices = @transform_3, window_bounds = array<i64: 1, 128>}, {pipeline_mode = #tpu.pipeline_mode<synchronous>, transform_indices = @transform_4, window_bounds = array<i64: 1, 1>}, {transform_indices = @transform_5, window_bounds = array<i64: 512, 1>}]} {
    %c0 = arith.constant 0 : index
    %c0_0 = arith.constant 0 : index
    %0 = vector.load %arg1[%c0, %c0_0] : memref<512x32xbf16, #tpu.memory_space<vmem>>, vector<512x32xbf16>
    %c0_1 = arith.constant 0 : index
    %c0_2 = arith.constant 0 : index
    %1 = vector.load %arg2[%c0_1, %c0_2] : memref<32x128xbf16, #tpu.memory_space<vmem>>, vector<32x128xbf16>
    %cst = arith.constant dense<0.000000e+00> : vector<512x128xf32>
    %2 = tpu.matmul %0, %1, %cst {dimension_numbers = #tpu.dot_dimension_numbers<[1], [0], [0], [1], [0, 0, 1, 1], [], []>} : vector<512x32xbf16>, vector<32x128xbf16>, vector<512x128xf32> -> vector<512x128xf32>
    %c0_3 = arith.constant 0 : index
    %c0_4 = arith.constant 0 : index
    %3 = vector.load %arg3[%c0_3, %c0_4] : memref<1x128xf32, #tpu.memory_space<vmem>>, vector<1x128xf32>
    %4 = vector.broadcast %3 : vector<1x128xf32> to vector<512x128xf32>
    %5 = arith.addf %2, %4 : vector<512x128xf32>
    %c0_5 = arith.constant 0 : index
    %c0_6 = arith.constant 0 : index
    %6 = vector.load %arg4[%c0_5, %c0_6] : memref<1x128xf32, #tpu.memory_space<vmem>>, vector<1x128xf32>
    %7 = vector.broadcast %6 : vector<1x128xf32> to vector<512x128xf32>
    %8 = arith.mulf %5, %7 : vector<512x128xf32>
    %cst_7 = arith.constant dense<0.000000e+00> : vector<512xf32>
    %9 = vector.multi_reduction <add>, %8, %cst_7 [1] : vector<512x128xf32> to vector<512xf32>
    %10 = vector.shape_cast %9 : vector<512xf32> to vector<512x1xf32>
    %c0_8 = arith.constant 0 : index
    %c0_9 = arith.constant 0 : index
    %11 = vector.load %arg5[%c0_8, %c0_9] : memref<1x1xf32, #tpu.memory_space<vmem>>, vector<1x1xf32>
    %12 = vector.broadcast %11 : vector<1x1xf32> to vector<512x1xf32>
    %13 = arith.addf %10, %12 : vector<512x1xf32>
    %cst_10 = arith.constant 0.000000e+00 : f32
    %14 = vector.broadcast %cst_10 : f32 to vector<512x1xf32>
    %15 = arith.subf %14, %13 : vector<512x1xf32>
    %16 = math.exp %15 : vector<512x1xf32>
    %cst_11 = arith.constant 1.000000e+00 : f32
    %17 = vector.broadcast %cst_11 : f32 to vector<512x1xf32>
    %18 = arith.addf %17, %16 : vector<512x1xf32>
    %19 = tpu.reciprocal %18 {approx = true} : vector<512x1xf32> -> vector<512x1xf32>
    %c0_12 = arith.constant 0 : index
    %c0_13 = arith.constant 0 : index
    %20 = vector.load %arg6[%c0_12, %c0_13] : memref<512x1xf32, #tpu.memory_space<vmem>>, vector<512x1xf32>
    tpu.vector_store %arg6[%c0_12, %c0_13], %19 {strides = array<i32>} : memref<512x1xf32, #tpu.memory_space<vmem>>, vector<512x1xf32>,
    return
  }
  func.func @transform_0(%arg0: i32) -> (i32, i32) {
    %c0_i32 = arith.constant 0 : i32
    %c0_i32_0 = arith.constant 0 : i32
    return %arg0, %c0_i32 : i32, i32
  }
  func.func @transform_1(%arg0: i32) -> (i32, i32) {
    %c0_i32 = arith.constant 0 : i32
    %c0_i32_0 = arith.constant 0 : i32
    %c0_i32_1 = arith.constant 0 : i32
    return %c0_i32, %c0_i32_0 : i32, i32
  }
  func.func @transform_2(%arg0: i32) -> (i32, i32) {
    %c0_i32 = arith.constant 0 : i32
    %c0_i32_0 = arith.constant 0 : i32
    %c0_i32_1 = arith.constant 0 : i32
    return %c0_i32, %c0_i32_0 : i32, i32
  }
  func.func @transform_3(%arg0: i32) -> (i32, i32) {
    %c0_i32 = arith.constant 0 : i32
    %c0_i32_0 = arith.constant 0 : i32
    %c0_i32_1 = arith.constant 0 : i32
    return %c0_i32, %c0_i32_0 : i32, i32
  }
  func.func @transform_4(%arg0: i32) -> (i32, i32) {
    %c0_i32 = arith.constant 0 : i32
    %c0_i32_0 = arith.constant 0 : i32
    %c0_i32_1 = arith.constant 0 : i32
    return %c0_i32, %c0_i32_0 : i32, i32
  }
  func.func @transform_5(%arg0: i32) -> (i32, i32) {
    %c0_i32 = arith.constant 0 : i32
    %c0_i32_0 = arith.constant 0 : i32
    return %arg0, %c0_i32 : i32, i32
  }
}

</mosaic_0001>

<llo_original>
// kernel: classification_layer.1
$region0: #{classification_layer.1}
  #allocation0 [shape = 'u32[]', space=smem, size = 0x4, offset = 0x4, fixed_abs, tag = 'smem constant byte address 0x4 - core index']
  #allocation1 [shape = 'u32[144,128]{1,0:T(1,128)}', space=vmem, size = 0x12000, scoped, tag = 'internal scratch']
  #allocation2 [shape = 'f32[1,1]{1,0:T(1,128)S(1)}', space=vmem, size = 0x200, scoped, tag = 'scoped memory for classification_layer.1']
  %s0 = inlined_call_operand.vmem [shape: bf16[512,32], index: 0, kind: input, shape index: {}]
  %s1 = inlined_call_operand.vmem [shape: bf16[32,128], index: 1, kind: input, shape index: {}]
  %s2 = inlined_call_operand.vmem [shape: f32[1,128], index: 2, kind: input, shape index: {}]
  %s3 = inlined_call_operand.vmem [shape: f32[1,128], index: 3, kind: input, shape index: {}]
  %s4 = inlined_call_operand.<no memory space> [shape: f32[1,1], index: 4, kind: input, shape index: {}]
  %s5 = inlined_call_operand.vmem [shape: f32[512,1], index: 5, kind: output, shape index: {}]
  %s6 = sld [smem:[#allocation0]]
  $region30: #{classification_layer.1} parent=0
    _
  %s8 = ssub.s32 1, %s6
  %s9 = scalar_select 0, %s8, %s6
  %v10 = vstv %s4
  %11 = vst [vmem:[#allocation2] sm:$0x1] %v10
  // Predicated region
  $region2: #{classification_layer.1} parent=0 // pred_check
    _
  $region3: #{classification_layer.1} parent=0 // pred_check_branch
    %13 = sbr.rel (0) target = $region5
  $region4: #{classification_layer.1} parent=0 // pred_region
    _
  $region5: #{classification_layer.1} parent=0 // pred_fallthru
    _
  // Predicated region
  $region6: #{classification_layer.1} parent=0 // pred_check
    _
  $region7: #{classification_layer.1} parent=0 // pred_check_branch
    %15 = sbr.rel (0) target = $region9
  $region8: #{classification_layer.1} parent=0 // pred_region
    _
  $region9: #{classification_layer.1} parent=0 // pred_fallthru
    _
  // Predicated region
  $region10: #{classification_layer.1} parent=0 // pred_check
    _
  $region11: #{classification_layer.1} parent=0 // pred_check_branch
    %17 = sbr.rel (0) target = $region13
  $region12: #{classification_layer.1} parent=0 // pred_region
    _
  $region13: #{classification_layer.1} parent=0 // pred_fallthru
    _
  // Predicated region
  $region14: #{classification_layer.1} parent=0 // pred_check
    _
  $region15: #{classification_layer.1} parent=0 // pred_check_branch
    %19 = sbr.rel (0) target = $region17
  $region16: #{classification_layer.1} parent=0 // pred_region
    _
  $region17: #{classification_layer.1} parent=0 // pred_fallthru
    _
  // Predicated region
  $region18: #{classification_layer.1} parent=0 // pred_check
    _
  $region19: #{classification_layer.1} parent=0 // pred_check_branch
    %21 = sbr.rel (0) target = $region21
  $region20: #{classification_layer.1} parent=0 // pred_region
    _
  $region21: #{classification_layer.1} parent=0 // pred_fallthru
    _
  %v23 = vld [vmem:[%s0] sm:$0xf]
  %v24 = vld [vmem:[%s0 + $0x4] sm:$0xf]
  %v25 = vld [vmem:[%s0 + $0x8] sm:$0xf]
  %v26 = vld [vmem:[%s0 + $0xc] sm:$0xf]
  %v27 = vld [vmem:[%s0 + $0x10] sm:$0xf]
  %v28 = vld [vmem:[%s0 + $0x14] sm:$0xf]
  %v29 = vld [vmem:[%s0 + $0x18] sm:$0xf]
  %v30 = vld [vmem:[%s0 + $0x1c] sm:$0xf]
  %v31 = vld [vmem:[%s0 + $0x20] sm:$0xf]
  %v32 = vld [vmem:[%s0 + $0x24] sm:$0xf]
  %v33 = vld [vmem:[%s0 + $0x28] sm:$0xf]
  %v34 = vld [vmem:[%s0 + $0x2c] sm:$0xf]
  %v35 = vld [vmem:[%s0 + $0x30] sm:$0xf]
  %v36 = vld [vmem:[%s0 + $0x34] sm:$0xf]
  %v37 = vld [vmem:[%s0 + $0x38] sm:$0xf]
  %v38 = vld [vmem:[%s0 + $0x3c] sm:$0xf]
  %v39 = vld [vmem:[%s0 + $0x40] sm:$0xf]
  %v40 = vld [vmem:[%s0 + $0x44] sm:$0xf]
  %v41 = vld [vmem:[%s0 + $0x48] sm:$0xf]
  %v42 = vld [vmem:[%s0 + $0x4c] sm:$0xf]
  %v43 = vld [vmem:[%s0 + $0x50] sm:$0xf]
  %v44 = vld [vmem:[%s0 + $0x54] sm:$0xf]
  %v45 = vld [vmem:[%s0 + $0x58] sm:$0xf]
  %v46 = vld [vmem:[%s0 + $0x5c] sm:$0xf]
  %v47 = vld [vmem:[%s0 + $0x60] sm:$0xf]
  %v48 = vld [vmem:[%s0 + $0x64] sm:$0xf]
  %v49 = vld [vmem:[%s0 + $0x68] sm:$0xf]
  %v50 = vld [vmem:[%s0 + $0x6c] sm:$0xf]
  %v51 = vld [vmem:[%s0 + $0x70] sm:$0xf]
  %v52 = vld [vmem:[%s0 + $0x74] sm:$0xf]
  %v53 = vld [vmem:[%s0 + $0x78] sm:$0xf]
  %v54 = vld [vmem:[%s0 + $0x7c] sm:$0xf]
  %v55 = vld [vmem:[%s0 + $0x80] sm:$0xf]
  %v56 = vld [vmem:[%s0 + $0x84] sm:$0xf]
  %v57 = vld [vmem:[%s0 + $0x88] sm:$0xf]
  %v58 = vld [vmem:[%s0 + $0x8c] sm:$0xf]
  %v59 = vld [vmem:[%s0 + $0x90] sm:$0xf]
  %v60 = vld [vmem:[%s0 + $0x94] sm:$0xf]
  %v61 = vld [vmem:[%s0 + $0x98] sm:$0xf]
  %v62 = vld [vmem:[%s0 + $0x9c] sm:$0xf]
  %v63 = vld [vmem:[%s0 + $0xa0] sm:$0xf]
  %v64 = vld [vmem:[%s0 + $0xa4] sm:$0xf]
  %v65 = vld [vmem:[%s0 + $0xa8] sm:$0xf]
  %v66 = vld [vmem:[%s0 + $0xac] sm:$0xf]
  %v67 = vld [vmem:[%s0 + $0xb0] sm:$0xf]
  %v68 = vld [vmem:[%s0 + $0xb4] sm:$0xf]
  %v69 = vld [vmem:[%s0 + $0xb8] sm:$0xf]
  %v70 = vld [vmem:[%s0 + $0xbc] sm:$0xf]
  %v71 = vld [vmem:[%s0 + $0xc0] sm:$0xf]
  %v72 = vld [vmem:[%s0 + $0xc4] sm:$0xf]
  %v73 = vld [vmem:[%s0 + $0xc8] sm:$0xf]
  %v74 = vld [vmem:[%s0 + $0xcc] sm:$0xf]
  %v75 = vld [vmem:[%s0 + $0xd0] sm:$0xf]
  %v76 = vld [vmem:[%s0 + $0xd4] sm:$0xf]
  %v77 = vld [vmem:[%s0 + $0xd8] sm:$0xf]
  %v78 = vld [vmem:[%s0 + $0xdc] sm:$0xf]
  %v79 = vld [vmem:[%s0 + $0xe0] sm:$0xf]
  %v80 = vld [vmem:[%s0 + $0xe4] sm:$0xf]
  %v81 = vld [vmem:[%s0 + $0xe8] sm:$0xf]
  %v82 = vld [vmem:[%s0 + $0xec] sm:$0xf]
  %v83 = vld [vmem:[%s0 + $0xf0] sm:$0xf]
  %v84 = vld [vmem:[%s0 + $0xf4] sm:$0xf]
  %v85 = vld [vmem:[%s0 + $0xf8] sm:$0xf]
  %v86 = vld [vmem:[%s0 + $0xfc] sm:$0xf]
  %v87 = vld [vmem:[%s1] sm:$0xf]
  %v88 = vld [vmem:[%s1 + $0x4] sm:$0xf]
  %v89 = vld [vmem:[%s1 + $0x8] sm:$0xf]
  %v90 = vld [vmem:[%s1 + $0xc] sm:$0xf]
  %v91 = vld [vmem:[%s2] sm:$0x1]
  %v93 = vlaneseq
  %v94 = vshrl.u32 %v93, 7
  %v95 = vsub.s32 0, %v94
  %v96 = vrot.slane %v91, %v95
  %v162 = vunpack.c.l.b16 %v23
  %v163 = vunpack.c.l.b16 %v24
  %v164 = vunpack.c.l.b16 %v25
  %v165 = vunpack.c.l.b16 %v26
  %v166 = vunpack.c.l.b16 %v27
  %v167 = vunpack.c.l.b16 %v28
  %v168 = vunpack.c.l.b16 %v29
  %v169 = vunpack.c.l.b16 %v30
  %v170 = vunpack.c.l.b16 %v31
  %v171 = vunpack.c.l.b16 %v32
  %v172 = vunpack.c.l.b16 %v33
  %v173 = vunpack.c.l.b16 %v34
  %v174 = vunpack.c.l.b16 %v35
  %v175 = vunpack.c.l.b16 %v36
  %v176 = vunpack.c.l.b16 %v37
  %v177 = vunpack.c.l.b16 %v38
  %v178 = vunpack.c.l.b16 %v39
  %v179 = vunpack.c.l.b16 %v40
  %v180 = vunpack.c.l.b16 %v41
  %v181 = vunpack.c.l.b16 %v42
  %v182 = vunpack.c.l.b16 %v43
  %v183 = vunpack.c.l.b16 %v44
  %v184 = vunpack.c.l.b16 %v45
  %v185 = vunpack.c.l.b16 %v46
  %v186 = vunpack.c.l.b16 %v47
  %v187 = vunpack.c.l.b16 %v48
  %v188 = vunpack.c.l.b16 %v49
  %v189 = vunpack.c.l.b16 %v50
  %v190 = vunpack.c.l.b16 %v51
  %v191 = vunpack.c.l.b16 %v52
  %v192 = vunpack.c.l.b16 %v53
  %v193 = vunpack.c.l.b16 %v54
  %v194 = vunpack.c.l.b16 %v55
  %v195 = vunpack.c.l.b16 %v56
  %v196 = vunpack.c.l.b16 %v57
  %v197 = vunpack.c.l.b16 %v58
  %v198 = vunpack.c.l.b16 %v59
  %v199 = vunpack.c.l.b16 %v60
  %v200 = vunpack.c.l.b16 %v61
  %v201 = vunpack.c.l.b16 %v62
  %v202 = vunpack.c.l.b16 %v63
  %v203 = vunpack.c.l.b16 %v64
  %v204 = vunpack.c.l.b16 %v65
  %v205 = vunpack.c.l.b16 %v66
  %v206 = vunpack.c.l.b16 %v67
  %v207 = vunpack.c.l.b16 %v68
  %v208 = vunpack.c.l.b16 %v69
  %v209 = vunpack.c.l.b16 %v70
  %v210 = vunpack.c.l.b16 %v71
  %v211 = vunpack.c.l.b16 %v72
  %v212 = vunpack.c.l.b16 %v73
  %v213 = vunpack.c.l.b16 %v74
  %v214 = vunpack.c.l.b16 %v75
  %v215 = vunpack.c.l.b16 %v76
  %v216 = vunpack.c.l.b16 %v77
  %v217 = vunpack.c.l.b16 %v78
  %v218 = vunpack.c.l.b16 %v79
  %v219 = vunpack.c.l.b16 %v80
  %v220 = vunpack.c.l.b16 %v81
  %v221 = vunpack.c.l.b16 %v82
  %v222 = vunpack.c.l.b16 %v83
  %v223 = vunpack.c.l.b16 %v84
  %v224 = vunpack.c.l.b16 %v85
  %v225 = vunpack.c.l.b16 %v86
  %v226 = vpack.c.b16 %v163, %v162
  %v227 = vpack.c.b16 %v165, %v164
  %v228 = vpack.c.b16 %v167, %v166
  %v229 = vpack.c.b16 %v169, %v168
  %v230 = vpack.c.b16 %v171, %v170
  %v231 = vpack.c.b16 %v173, %v172
  %v232 = vpack.c.b16 %v175, %v174
  %v233 = vpack.c.b16 %v177, %v176
  %v234 = vpack.c.b16 %v179, %v178
  %v235 = vpack.c.b16 %v181, %v180
  %v236 = vpack.c.b16 %v183, %v182
  %v237 = vpack.c.b16 %v185, %v184
  %v238 = vpack.c.b16 %v187, %v186
  %v239 = vpack.c.b16 %v189, %v188
  %v240 = vpack.c.b16 %v191, %v190
  %v241 = vpack.c.b16 %v193, %v192
  %v242 = vpack.c.b16 %v195, %v194
  %v243 = vpack.c.b16 %v197, %v196
  %v244 = vpack.c.b16 %v199, %v198
  %v245 = vpack.c.b16 %v201, %v200
  %v246 = vpack.c.b16 %v203, %v202
  %v247 = vpack.c.b16 %v205, %v204
  %v248 = vpack.c.b16 %v207, %v206
  %v249 = vpack.c.b16 %v209, %v208
  %v250 = vpack.c.b16 %v211, %v210
  %v251 = vpack.c.b16 %v213, %v212
  %v252 = vpack.c.b16 %v215, %v214
  %v253 = vpack.c.b16 %v217, %v216
  %v254 = vpack.c.b16 %v219, %v218
  %v255 = vpack.c.b16 %v221, %v220
  %v256 = vpack.c.b16 %v223, %v222
  %v257 = vpack.c.b16 %v225, %v224
  %v262 = vunpack.c.l.b16 %v87
  %v263 = vunpack.c.l.b16 %v88
  %v264 = vunpack.c.l.b16 %v89
  %v265 = vunpack.c.l.b16 %v90
  %v266 = vpack.c.b16 %v263, %v262
  %v267 = vpack.c.b16 %v265, %v264
  %vm270 = vcmask 261120
  %v272 = vsel %vm270, %v226, 0
  %v275 = vsel %vm270, %v227, 0
  %v278 = vsel %vm270, %v228, 0
  %v281 = vsel %vm270, %v229, 0
  %v284 = vsel %vm270, %v230, 0
  %v287 = vsel %vm270, %v231, 0
  %v290 = vsel %vm270, %v232, 0
  %v293 = vsel %vm270, %v233, 0
  %v296 = vsel %vm270, %v234, 0
  %v299 = vsel %vm270, %v235, 0
  %v302 = vsel %vm270, %v236, 0
  %v305 = vsel %vm270, %v237, 0
  %v308 = vsel %vm270, %v238, 0
  %v311 = vsel %vm270, %v239, 0
  %v314 = vsel %vm270, %v240, 0
  %v317 = vsel %vm270, %v241, 0
  %v320 = vsel %vm270, %v242, 0
  %v323 = vsel %vm270, %v243, 0
  %v326 = vsel %vm270, %v244, 0
  %v329 = vsel %vm270, %v245, 0
  %v332 = vsel %vm270, %v246, 0
  %v335 = vsel %vm270, %v247, 0
  %v338 = vsel %vm270, %v248, 0
  %v341 = vsel %vm270, %v249, 0
  %v344 = vsel %vm270, %v250, 0
  %v347 = vsel %vm270, %v251, 0
  %v350 = vsel %vm270, %v252, 0
  %v353 = vsel %vm270, %v253, 0
  %v356 = vsel %vm270, %v254, 0
  %v359 = vsel %vm270, %v255, 0
  %v362 = vsel %vm270, %v256, 0
  %v365 = vsel %vm270, %v257, 0
  %367 = vmatprep.subr.bf16.mxu0 0
  %368 = vmatpush1.bf16.msra.mxu0 0
  %369 = vmatprep.subr.bf16.mxu0 0
  %370 = vmatpush1.bf16.msra.mxu0 0
  %371 = vmatprep.subr.bf16.mxu0 0
  %372 = vmatpush1.bf16.msra.mxu0 0
  %373 = vmatprep.subr.bf16.mxu0 0
  %374 = vmatpush1.bf16.msra.mxu0 0
  %375 = vmatprep.subr.bf16.mxu0 0
  %376 = vmatpush1.bf16.msra.mxu0 0
  %377 = vmatprep.subr.bf16.mxu0 0
  %378 = vmatpush1.bf16.msra.mxu0 0
  %379 = vmatprep.subr.bf16.mxu0 0
  %380 = vmatpush1.bf16.msra.mxu0 %v267
  %381 = vmatprep.subr.bf16.mxu0 0
  %382 = vmatpush1.bf16.msra.mxu0 %v266
  %383 = vmatprep.subr.bf16.mxu0 0
  %384 = vmatpush2.bf16.msra.mxu0 0
  %385 = vmatprep.subr.bf16.mxu0 0
  %386 = vmatpush2.bf16.msra.mxu0 0
  %387 = vmatprep.subr.bf16.mxu0 0
  %388 = vmatpush2.bf16.msra.mxu0 0
  %389 = vmatprep.subr.bf16.mxu0 0
  %390 = vmatpush2.bf16.msra.mxu0 0
  %391 = vmatprep.subr.bf16.mxu0 0
  %392 = vmatpush2.bf16.msra.mxu0 0
  %393 = vmatprep.subr.bf16.mxu0 0
  %394 = vmatpush2.bf16.msra.mxu0 0
  %395 = vmatprep.subr.bf16.mxu0 0
  %396 = vmatpush2.bf16.msra.mxu0 0
  %397 = vmatprep.subr.bf16.mxu0 0
  %398 = vmatpush2.bf16.msra.mxu0 0
  %399 = vmatprep.mubr.bf16.mxu0 0
  %400 = vmatmul.mubr.bf16.gmra.mxu0 %v272
  %v401 = vpop.f32.mrf.mxu0
  %v402 = vadd.f32 %v96, %v401
  %v403 = vpop.f32.mrf.mxu0
  %v404 = vpop.f32.mrf.mxu0
  %v405 = vadd.f32 %v96, %v404
  %v406 = vpop.f32.mrf.mxu0
  %407 = vmatprep.mubr.bf16.mxu0 0
  %408 = vmatmul.mubr.bf16.gmra.mxu0 %v275
  %v409 = vpop.f32.mrf.mxu0
  %v410 = vadd.f32 %v96, %v409
  %v411 = vpop.f32.mrf.mxu0
  %v412 = vpop.f32.mrf.mxu0
  %v413 = vadd.f32 %v96, %v412
  %v414 = vpop.f32.mrf.mxu0
  %415 = vmatprep.mubr.bf16.mxu0 0
  %416 = vmatmul.mubr.bf16.gmra.mxu0 %v278
  %v417 = vpop.f32.mrf.mxu0
  %v418 = vadd.f32 %v96, %v417
  %v419 = vpop.f32.mrf.mxu0
  %v420 = vpop.f32.mrf.mxu0
  %v421 = vadd.f32 %v96, %v420
  %v422 = vpop.f32.mrf.mxu0
  %423 = vmatprep.mubr.bf16.mxu0 0
  %424 = vmatmul.mubr.bf16.gmra.mxu0 %v281
  %v425 = vpop.f32.mrf.mxu0
  %v426 = vadd.f32 %v96, %v425
  %v427 = vpop.f32.mrf.mxu0
  %v428 = vpop.f32.mrf.mxu0
  %v429 = vadd.f32 %v96, %v428
  %v430 = vpop.f32.mrf.mxu0
  %431 = vmatprep.mubr.bf16.mxu0 0
  %432 = vmatmul.mubr.bf16.gmra.mxu0 %v284
  %v433 = vpop.f32.mrf.mxu0
  %v434 = vadd.f32 %v96, %v433
  %v435 = vpop.f32.mrf.mxu0
  %v436 = vpop.f32.mrf.mxu0
  %v437 = vadd.f32 %v96, %v436
  %v438 = vpop.f32.mrf.mxu0
  %439 = vmatprep.mubr.bf16.mxu0 0
  %440 = vmatmul.mubr.bf16.gmra.mxu0 %v287
  %v441 = vpop.f32.mrf.mxu0
  %v442 = vadd.f32 %v96, %v441
  %v443 = vpop.f32.mrf.mxu0
  %v444 = vpop.f32.mrf.mxu0
  %v445 = vadd.f32 %v96, %v444
  %v446 = vpop.f32.mrf.mxu0
  %447 = vmatprep.mubr.bf16.mxu0 0
  %448 = vmatmul.mubr.bf16.gmra.mxu0 %v290
  %v449 = vpop.f32.mrf.mxu0
  %v450 = vadd.f32 %v96, %v449
  %v451 = vpop.f32.mrf.mxu0
  %v452 = vpop.f32.mrf.mxu0
  %v453 = vadd.f32 %v96, %v452
  %v454 = vpop.f32.mrf.mxu0
  %455 = vmatprep.mubr.bf16.mxu0 0
  %456 = vmatmul.mubr.bf16.gmra.mxu0 %v293
  %v457 = vpop.f32.mrf.mxu0
  %v458 = vadd.f32 %v96, %v457
  %v459 = vpop.f32.mrf.mxu0
  %v460 = vpop.f32.mrf.mxu0
  %v461 = vadd.f32 %v96, %v460
  %v462 = vpop.f32.mrf.mxu0
  %463 = vmatprep.mubr.bf16.mxu0 0
  %464 = vmatmul.mubr.bf16.gmra.mxu0 %v296
  %v465 = vpop.f32.mrf.mxu0
  %v466 = vadd.f32 %v96, %v465
  %v467 = vpop.f32.mrf.mxu0
  %v468 = vpop.f32.mrf.mxu0
  %v469 = vadd.f32 %v96, %v468
  %v470 = vpop.f32.mrf.mxu0
  %471 = vmatprep.mubr.bf16.mxu0 0
  %472 = vmatmul.mubr.bf16.gmra.mxu0 %v299
  %v473 = vpop.f32.mrf.mxu0
  %v474 = vadd.f32 %v96, %v473
  %v475 = vpop.f32.mrf.mxu0
  %v476 = vpop.f32.mrf.mxu0
  %v477 = vadd.f32 %v96, %v476
  %v478 = vpop.f32.mrf.mxu0
  %479 = vmatprep.mubr.bf16.mxu0 0
  %480 = vmatmul.mubr.bf16.gmra.mxu0 %v302
  %v481 = vpop.f32.mrf.mxu0
  %v482 = vadd.f32 %v96, %v481
  %v483 = vpop.f32.mrf.mxu0
  %v484 = vpop.f32.mrf.mxu0
  %v485 = vadd.f32 %v96, %v484
  %v486 = vpop.f32.mrf.mxu0
  %487 = vmatprep.mubr.bf16.mxu0 0
  %488 = vmatmul.mubr.bf16.gmra.mxu0 %v305
  %v489 = vpop.f32.mrf.mxu0
  %v490 = vadd.f32 %v96, %v489
  %v491 = vpop.f32.mrf.mxu0
  %v492 = vpop.f32.mrf.mxu0
  %v493 = vadd.f32 %v96, %v492
  %v494 = vpop.f32.mrf.mxu0
  %495 = vmatprep.mubr.bf16.mxu0 0
  %496 = vmatmul.mubr.bf16.gmra.mxu0 %v308
  %v497 = vpop.f32.mrf.mxu0
  %v498 = vadd.f32 %v96, %v497
  %v499 = vpop.f32.mrf.mxu0
  %v500 = vpop.f32.mrf.mxu0
  %v501 = vadd.f32 %v96, %v500
  %v502 = vpop.f32.mrf.mxu0
  %503 = vmatprep.mubr.bf16.mxu0 0
  %504 = vmatmul.mubr.bf16.gmra.mxu0 %v311
  %v505 = vpop.f32.mrf.mxu0
  %v506 = vadd.f32 %v96, %v505
  %v507 = vpop.f32.mrf.mxu0
  %v508 = vpop.f32.mrf.mxu0
  %v509 = vadd.f32 %v96, %v508
  %v510 = vpop.f32.mrf.mxu0
  %511 = vmatprep.mubr.bf16.mxu0 0
  %512 = vmatmul.mubr.bf16.gmra.mxu0 %v314
  %v513 = vpop.f32.mrf.mxu0
  %v514 = vadd.f32 %v96, %v513
  %v515 = vpop.f32.mrf.mxu0
  %v516 = vpop.f32.mrf.mxu0
  %v517 = vadd.f32 %v96, %v516
  %v518 = vpop.f32.mrf.mxu0
  %519 = vmatprep.mubr.bf16.mxu0 0
  %520 = vmatmul.mubr.bf16.gmra.mxu0 %v317
  %v521 = vpop.f32.mrf.mxu0
  %v522 = vadd.f32 %v96, %v521
  %v523 = vpop.f32.mrf.mxu0
  %v524 = vpop.f32.mrf.mxu0
  %v525 = vadd.f32 %v96, %v524
  %v526 = vpop.f32.mrf.mxu0
  %527 = vmatprep.mubr.bf16.mxu0 0
  %528 = vmatmul.mubr.bf16.gmra.mxu0 %v320
  %v529 = vpop.f32.mrf.mxu0
  %v530 = vadd.f32 %v96, %v529
  %v531 = vpop.f32.mrf.mxu0
  %v532 = vpop.f32.mrf.mxu0
  %v533 = vadd.f32 %v96, %v532
  %v534 = vpop.f32.mrf.mxu0
  %535 = vmatprep.mubr.bf16.mxu0 0
  %536 = vmatmul.mubr.bf16.gmra.mxu0 %v323
  %v537 = vpop.f32.mrf.mxu0
  %v538 = vadd.f32 %v96, %v537
  %v539 = vpop.f32.mrf.mxu0
  %v540 = vpop.f32.mrf.mxu0
  %v541 = vadd.f32 %v96, %v540
  %v542 = vpop.f32.mrf.mxu0
  %543 = vmatprep.mubr.bf16.mxu0 0
  %544 = vmatmul.mubr.bf16.gmra.mxu0 %v326
  %v545 = vpop.f32.mrf.mxu0
  %v546 = vadd.f32 %v96, %v545
  %v547 = vpop.f32.mrf.mxu0
  %v548 = vpop.f32.mrf.mxu0
  %v549 = vadd.f32 %v96, %v548
  %v550 = vpop.f32.mrf.mxu0
  %551 = vmatprep.mubr.bf16.mxu0 0
  %552 = vmatmul.mubr.bf16.gmra.mxu0 %v329
  %v553 = vpop.f32.mrf.mxu0
  %v554 = vadd.f32 %v96, %v553
  %v555 = vpop.f32.mrf.mxu0
  %v556 = vpop.f32.mrf.mxu0
  %v557 = vadd.f32 %v96, %v556
  %v558 = vpop.f32.mrf.mxu0
  %559 = vmatprep.mubr.bf16.mxu0 0
  %560 = vmatmul.mubr.bf16.gmra.mxu0 %v332
  %v561 = vpop.f32.mrf.mxu0
  %v562 = vadd.f32 %v96, %v561
  %v563 = vpop.f32.mrf.mxu0
  %v564 = vpop.f32.mrf.mxu0
  %v565 = vadd.f32 %v96, %v564
  %v566 = vpop.f32.mrf.mxu0
  %567 = vmatprep.mubr.bf16.mxu0 0
  %568 = vmatmul.mubr.bf16.gmra.mxu0 %v335
  %v569 = vpop.f32.mrf.mxu0
  %v570 = vadd.f32 %v96, %v569
  %v571 = vpop.f32.mrf.mxu0
  %v572 = vpop.f32.mrf.mxu0
  %v573 = vadd.f32 %v96, %v572
  %v574 = vpop.f32.mrf.mxu0
  %575 = vmatprep.mubr.bf16.mxu0 0
  %576 = vmatmul.mubr.bf16.gmra.mxu0 %v338
  %v577 = vpop.f32.mrf.mxu0
  %v578 = vadd.f32 %v96, %v577
  %v579 = vpop.f32.mrf.mxu0
  %v580 = vpop.f32.mrf.mxu0
  %v581 = vadd.f32 %v96, %v580
  %v582 = vpop.f32.mrf.mxu0
  %583 = vmatprep.mubr.bf16.mxu0 0
  %584 = vmatmul.mubr.bf16.gmra.mxu0 %v341
  %v585 = vpop.f32.mrf.mxu0
  %v586 = vadd.f32 %v96, %v585
  %v587 = vpop.f32.mrf.mxu0
  %v588 = vpop.f32.mrf.mxu0
  %v589 = vadd.f32 %v96, %v588
  %v590 = vpop.f32.mrf.mxu0
  %591 = vmatprep.mubr.bf16.mxu0 0
  %592 = vmatmul.mubr.bf16.gmra.mxu0 %v344
  %v593 = vpop.f32.mrf.mxu0
  %v594 = vadd.f32 %v96, %v593
  %v595 = vpop.f32.mrf.mxu0
  %v596 = vpop.f32.mrf.mxu0
  %v597 = vadd.f32 %v96, %v596
  %v598 = vpop.f32.mrf.mxu0
  %599 = vmatprep.mubr.bf16.mxu0 0
  %600 = vmatmul.mubr.bf16.gmra.mxu0 %v347
  %v601 = vpop.f32.mrf.mxu0
  %v602 = vadd.f32 %v96, %v601
  %v603 = vpop.f32.mrf.mxu0
  %v604 = vpop.f32.mrf.mxu0
  %v605 = vadd.f32 %v96, %v604
  %v606 = vpop.f32.mrf.mxu0
  %607 = vmatprep.mubr.bf16.mxu0 0
  %608 = vmatmul.mubr.bf16.gmra.mxu0 %v350
  %v609 = vpop.f32.mrf.mxu0
  %v610 = vadd.f32 %v96, %v609
  %v611 = vpop.f32.mrf.mxu0
  %v612 = vpop.f32.mrf.mxu0
  %v613 = vadd.f32 %v96, %v612
  %v614 = vpop.f32.mrf.mxu0
  %615 = vmatprep.mubr.bf16.mxu0 0
  %616 = vmatmul.mubr.bf16.gmra.mxu0 %v353
  %v617 = vpop.f32.mrf.mxu0
  %v618 = vadd.f32 %v96, %v617
  %v619 = vpop.f32.mrf.mxu0
  %v620 = vpop.f32.mrf.mxu0
  %v621 = vadd.f32 %v96, %v620
  %v622 = vpop.f32.mrf.mxu0
  %623 = vmatprep.mubr.bf16.mxu0 0
  %624 = vmatmul.mubr.bf16.gmra.mxu0 %v356
  %v625 = vpop.f32.mrf.mxu0
  %v626 = vadd.f32 %v96, %v625
  %v627 = vpop.f32.mrf.mxu0
  %v628 = vpop.f32.mrf.mxu0
  %v629 = vadd.f32 %v96, %v628
  %v630 = vpop.f32.mrf.mxu0
  %631 = vmatprep.mubr.bf16.mxu0 0
  %632 = vmatmul.mubr.bf16.gmra.mxu0 %v359
  %v633 = vpop.f32.mrf.mxu0
  %v634 = vadd.f32 %v96, %v633
  %v635 = vpop.f32.mrf.mxu0
  %v636 = vpop.f32.mrf.mxu0
  %v637 = vadd.f32 %v96, %v636
  %v638 = vpop.f32.mrf.mxu0
  %639 = vmatprep.mubr.bf16.mxu0 0
  %640 = vmatmul.mubr.bf16.gmra.mxu0 %v362
  %v641 = vpop.f32.mrf.mxu0
  %v642 = vadd.f32 %v96, %v641
  %v643 = vpop.f32.mrf.mxu0
  %v644 = vpop.f32.mrf.mxu0
  %v645 = vadd.f32 %v96, %v644
  %v646 = vpop.f32.mrf.mxu0
  %647 = vmatprep.mubr.bf16.mxu0 0
  %648 = vmatmul.mubr.bf16.gmra.mxu0 %v365
  %v649 = vpop.f32.mrf.mxu0
  %v650 = vadd.f32 %v96, %v649
  %v651 = vpop.f32.mrf.mxu0
  %v652 = vpop.f32.mrf.mxu0
  %v653 = vadd.f32 %v96, %v652
  %v654 = vpop.f32.mrf.mxu0
  %655 = vdwg.mxu0
  %v656 = vld [vmem:[%s3] sm:$0x1]
  %v658 = vlaneseq
  %v659 = vshrl.u32 %v658, 7
  %v660 = vsub.s32 0, %v659
  %v661 = vrot.slane %v656, %v660
  %v663 = vmul.f32 %v402, %v661
  %v664 = vmul.f32 %v405, %v661
  %v665 = vmul.f32 %v410, %v661
  %v666 = vmul.f32 %v413, %v661
  %v667 = vmul.f32 %v418, %v661
  %v668 = vmul.f32 %v421, %v661
  %v669 = vmul.f32 %v426, %v661
  %v670 = vmul.f32 %v429, %v661
  %v671 = vmul.f32 %v434, %v661
  %v672 = vmul.f32 %v437, %v661
  %v673 = vmul.f32 %v442, %v661
  %v674 = vmul.f32 %v445, %v661
  %v675 = vmul.f32 %v450, %v661
  %v676 = vmul.f32 %v453, %v661
  %v677 = vmul.f32 %v458, %v661
  %v678 = vmul.f32 %v461, %v661
  %v679 = vmul.f32 %v466, %v661
  %v680 = vmul.f32 %v469, %v661
  %v681 = vmul.f32 %v474, %v661
  %v682 = vmul.f32 %v477, %v661
  %v683 = vmul.f32 %v482, %v661
  %v684 = vmul.f32 %v485, %v661
  %v685 = vmul.f32 %v490, %v661
  %v686 = vmul.f32 %v493, %v661
  %v687 = vmul.f32 %v498, %v661
  %v688 = vmul.f32 %v501, %v661
  %v689 = vmul.f32 %v506, %v661
  %v690 = vmul.f32 %v509, %v661
  %v691 = vmul.f32 %v514, %v661
  %v692 = vmul.f32 %v517, %v661
  %v693 = vmul.f32 %v522, %v661
  %v694 = vmul.f32 %v525, %v661
  %v695 = vmul.f32 %v530, %v661
  %v696 = vmul.f32 %v533, %v661
  %v697 = vmul.f32 %v538, %v661
  %v698 = vmul.f32 %v541, %v661
  %v699 = vmul.f32 %v546, %v661
  %v700 = vmul.f32 %v549, %v661
  %v701 = vmul.f32 %v554, %v661
  %v702 = vmul.f32 %v557, %v661
  %v703 = vmul.f32 %v562, %v661
  %v704 = vmul.f32 %v565, %v661
  %v705 = vmul.f32 %v570, %v661
  %v706 = vmul.f32 %v573, %v661
  %v707 = vmul.f32 %v578, %v661
  %v708 = vmul.f32 %v581, %v661
  %v709 = vmul.f32 %v586, %v661
  %v710 = vmul.f32 %v589, %v661
  %v711 = vmul.f32 %v594, %v661
  %v712 = vmul.f32 %v597, %v661
  %v713 = vmul.f32 %v602, %v661
  %v714 = vmul.f32 %v605, %v661
  %v715 = vmul.f32 %v610, %v661
  %v716 = vmul.f32 %v613, %v661
  %v717 = vmul.f32 %v618, %v661
  %v718 = vmul.f32 %v621, %v661
  %v719 = vmul.f32 %v626, %v661
  %v720 = vmul.f32 %v629, %v661
  %v721 = vmul.f32 %v634, %v661
  %v722 = vmul.f32 %v637, %v661
  %v723 = vmul.f32 %v642, %v661
  %v724 = vmul.f32 %v645, %v661
  %v725 = vmul.f32 %v650, %v661
  %v726 = vmul.f32 %v653, %v661
  %727 = vadd.xlane.f32.xlu0 %v663
  %v728 = vpop.xlane.xlu0 %727
  %729 = vadd.xlane.f32.xlu0 %v664
  %v730 = vpop.xlane.xlu0 %729
  %731 = vadd.xlane.f32.xlu0 %v665
  %v732 = vpop.xlane.xlu0 %731
  %733 = vadd.xlane.f32.xlu0 %v666
  %v734 = vpop.xlane.xlu0 %733
  %735 = vadd.xlane.f32.xlu0 %v667
  %v736 = vpop.xlane.xlu0 %735
  %737 = vadd.xlane.f32.xlu0 %v668
  %v738 = vpop.xlane.xlu0 %737
  %739 = vadd.xlane.f32.xlu0 %v669
  %v740 = vpop.xlane.xlu0 %739
  %741 = vadd.xlane.f32.xlu0 %v670
  %v742 = vpop.xlane.xlu0 %741
  %743 = vadd.xlane.f32.xlu0 %v671
  %v744 = vpop.xlane.xlu0 %743
  %745 = vadd.xlane.f32.xlu0 %v672
  %v746 = vpop.xlane.xlu0 %745
  %747 = vadd.xlane.f32.xlu0 %v673
  %v748 = vpop.xlane.xlu0 %747
  %749 = vadd.xlane.f32.xlu0 %v674
  %v750 = vpop.xlane.xlu0 %749
  %751 = vadd.xlane.f32.xlu0 %v675
  %v752 = vpop.xlane.xlu0 %751
  %753 = vadd.xlane.f32.xlu0 %v676
  %v754 = vpop.xlane.xlu0 %753
  %755 = vadd.xlane.f32.xlu0 %v677
  %v756 = vpop.xlane.xlu0 %755
  %757 = vadd.xlane.f32.xlu0 %v678
  %v758 = vpop.xlane.xlu0 %757
  %759 = vadd.xlane.f32.xlu0 %v679
  %v760 = vpop.xlane.xlu0 %759
  %761 = vadd.xlane.f32.xlu0 %v680
  %v762 = vpop.xlane.xlu0 %761
  %763 = vadd.xlane.f32.xlu0 %v681
  %v764 = vpop.xlane.xlu0 %763
  %765 = vadd.xlane.f32.xlu0 %v682
  %v766 = vpop.xlane.xlu0 %765
  %767 = vadd.xlane.f32.xlu0 %v683
  %v768 = vpop.xlane.xlu0 %767
  %769 = vadd.xlane.f32.xlu0 %v684
  %v770 = vpop.xlane.xlu0 %769
  %771 = vadd.xlane.f32.xlu0 %v685
  %v772 = vpop.xlane.xlu0 %771
  %773 = vadd.xlane.f32.xlu0 %v686
  %v774 = vpop.xlane.xlu0 %773
  %775 = vadd.xlane.f32.xlu0 %v687
  %v776 = vpop.xlane.xlu0 %775
  %777 = vadd.xlane.f32.xlu0 %v688
  %v778 = vpop.xlane.xlu0 %777
  %779 = vadd.xlane.f32.xlu0 %v689
  %v780 = vpop.xlane.xlu0 %779
  %781 = vadd.xlane.f32.xlu0 %v690
  %v782 = vpop.xlane.xlu0 %781
  %783 = vadd.xlane.f32.xlu0 %v691
  %v784 = vpop.xlane.xlu0 %783
  %785 = vadd.xlane.f32.xlu0 %v692
  %v786 = vpop.xlane.xlu0 %785
  %787 = vadd.xlane.f32.xlu0 %v693
  %v788 = vpop.xlane.xlu0 %787
  %789 = vadd.xlane.f32.xlu0 %v694
  %v790 = vpop.xlane.xlu0 %789
  %791 = vadd.xlane.f32.xlu0 %v695
  %v792 = vpop.xlane.xlu0 %791
  %793 = vadd.xlane.f32.xlu0 %v696
  %v794 = vpop.xlane.xlu0 %793
  %795 = vadd.xlane.f32.xlu0 %v697
  %v796 = vpop.xlane.xlu0 %795
  %797 = vadd.xlane.f32.xlu0 %v698
  %v798 = vpop.xlane.xlu0 %797
  %799 = vadd.xlane.f32.xlu0 %v699
  %v800 = vpop.xlane.xlu0 %799
  %801 = vadd.xlane.f32.xlu0 %v700
  %v802 = vpop.xlane.xlu0 %801
  %803 = vadd.xlane.f32.xlu0 %v701
  %v804 = vpop.xlane.xlu0 %803
  %805 = vadd.xlane.f32.xlu0 %v702
  %v806 = vpop.xlane.xlu0 %805
  %807 = vadd.xlane.f32.xlu0 %v703
  %v808 = vpop.xlane.xlu0 %807
  %809 = vadd.xlane.f32.xlu0 %v704
  %v810 = vpop.xlane.xlu0 %809
  %811 = vadd.xlane.f32.xlu0 %v705
  %v812 = vpop.xlane.xlu0 %811
  %813 = vadd.xlane.f32.xlu0 %v706
  %v814 = vpop.xlane.xlu0 %813
  %815 = vadd.xlane.f32.xlu0 %v707
  %v816 = vpop.xlane.xlu0 %815
  %817 = vadd.xlane.f32.xlu0 %v708
  %v818 = vpop.xlane.xlu0 %817
  %819 = vadd.xlane.f32.xlu0 %v709
  %v820 = vpop.xlane.xlu0 %819
  %821 = vadd.xlane.f32.xlu0 %v710
  %v822 = vpop.xlane.xlu0 %821
  %823 = vadd.xlane.f32.xlu0 %v711
  %v824 = vpop.xlane.xlu0 %823
  %825 = vadd.xlane.f32.xlu0 %v712
  %v826 = vpop.xlane.xlu0 %825
  %827 = vadd.xlane.f32.xlu0 %v713
  %v828 = vpop.xlane.xlu0 %827
  %829 = vadd.xlane.f32.xlu0 %v714
  %v830 = vpop.xlane.xlu0 %829
  %831 = vadd.xlane.f32.xlu0 %v715
  %v832 = vpop.xlane.xlu0 %831
  %833 = vadd.xlane.f32.xlu0 %v716
  %v834 = vpop.xlane.xlu0 %833
  %835 = vadd.xlane.f32.xlu0 %v717
  %v836 = vpop.xlane.xlu0 %835
  %837 = vadd.xlane.f32.xlu0 %v718
  %v838 = vpop.xlane.xlu0 %837
  %839 = vadd.xlane.f32.xlu0 %v719
  %v840 = vpop.xlane.xlu0 %839
  %841 = vadd.xlane.f32.xlu0 %v720
  %v842 = vpop.xlane.xlu0 %841
  %843 = vadd.xlane.f32.xlu0 %v721
  %v844 = vpop.xlane.xlu0 %843
  %845 = vadd.xlane.f32.xlu0 %v722
  %v846 = vpop.xlane.xlu0 %845
  %847 = vadd.xlane.f32.xlu0 %v723
  %v848 = vpop.xlane.xlu0 %847
  %849 = vadd.xlane.f32.xlu0 %v724
  %v850 = vpop.xlane.xlu0 %849
  %851 = vadd.xlane.f32.xlu0 %v725
  %v852 = vpop.xlane.xlu0 %851
  %853 = vadd.xlane.f32.xlu0 %v726
  %v854 = vpop.xlane.xlu0 %853
  %v855 = vld [vmem:[#allocation2] sm:$0x1]
  %v857 = vlaneseq
  %v858 = vshrl.u32 %v857, 7
  %v859 = vsub.s32 0, %v858
  %v860 = vrot.slane %v855, %v859
  %v862 = vadd.f32 %v728, %v860
  %v863 = vadd.f32 %v730, %v860
  %v864 = vadd.f32 %v732, %v860
  %v865 = vadd.f32 %v734, %v860
  %v866 = vadd.f32 %v736, %v860
  %v867 = vadd.f32 %v738, %v860
  %v868 = vadd.f32 %v740, %v860
  %v869 = vadd.f32 %v742, %v860
  %v870 = vadd.f32 %v744, %v860
  %v871 = vadd.f32 %v746, %v860
  %v872 = vadd.f32 %v748, %v860
  %v873 = vadd.f32 %v750, %v860
  %v874 = vadd.f32 %v752, %v860
  %v875 = vadd.f32 %v754, %v860
  %v876 = vadd.f32 %v756, %v860
  %v877 = vadd.f32 %v758, %v860
  %v878 = vadd.f32 %v760, %v860
  %v879 = vadd.f32 %v762, %v860
  %v880 = vadd.f32 %v764, %v860
  %v881 = vadd.f32 %v766, %v860
  %v882 = vadd.f32 %v768, %v860
  %v883 = vadd.f32 %v770, %v860
  %v884 = vadd.f32 %v772, %v860
  %v885 = vadd.f32 %v774, %v860
  %v886 = vadd.f32 %v776, %v860
  %v887 = vadd.f32 %v778, %v860
  %v888 = vadd.f32 %v780, %v860
  %v889 = vadd.f32 %v782, %v860
  %v890 = vadd.f32 %v784, %v860
  %v891 = vadd.f32 %v786, %v860
  %v892 = vadd.f32 %v788, %v860
  %v893 = vadd.f32 %v790, %v860
  %v894 = vadd.f32 %v792, %v860
  %v895 = vadd.f32 %v794, %v860
  %v896 = vadd.f32 %v796, %v860
  %v897 = vadd.f32 %v798, %v860
  %v898 = vadd.f32 %v800, %v860
  %v899 = vadd.f32 %v802, %v860
  %v900 = vadd.f32 %v804, %v860
  %v901 = vadd.f32 %v806, %v860
  %v902 = vadd.f32 %v808, %v860
  %v903 = vadd.f32 %v810, %v860
  %v904 = vadd.f32 %v812, %v860
  %v905 = vadd.f32 %v814, %v860
  %v906 = vadd.f32 %v816, %v860
  %v907 = vadd.f32 %v818, %v860
  %v908 = vadd.f32 %v820, %v860
  %v909 = vadd.f32 %v822, %v860
  %v910 = vadd.f32 %v824, %v860
  %v911 = vadd.f32 %v826, %v860
  %v912 = vadd.f32 %v828, %v860
  %v913 = vadd.f32 %v830, %v860
  %v914 = vadd.f32 %v832, %v860
  %v915 = vadd.f32 %v834, %v860
  %v916 = vadd.f32 %v836, %v860
  %v917 = vadd.f32 %v838, %v860
  %v918 = vadd.f32 %v840, %v860
  %v919 = vadd.f32 %v842, %v860
  %v920 = vadd.f32 %v844, %v860
  %v921 = vadd.f32 %v846, %v860
  %v922 = vadd.f32 %v848, %v860
  %v923 = vadd.f32 %v850, %v860
  %v924 = vadd.f32 %v852, %v860
  %v925 = vadd.f32 %v854, %v860
  %v926 = vsub.f32 0.0, %v862
  %v927 = vsub.f32 0.0, %v863
  %v928 = vsub.f32 0.0, %v864
  %v929 = vsub.f32 0.0, %v865
  %v930 = vsub.f32 0.0, %v866
  %v931 = vsub.f32 0.0, %v867
  %v932 = vsub.f32 0.0, %v868
  %v933 = vsub.f32 0.0, %v869
  %v934 = vsub.f32 0.0, %v870
  %v935 = vsub.f32 0.0, %v871
  %v936 = vsub.f32 0.0, %v872
  %v937 = vsub.f32 0.0, %v873
  %v938 = vsub.f32 0.0, %v874
  %v939 = vsub.f32 0.0, %v875
  %v940 = vsub.f32 0.0, %v876
  %v941 = vsub.f32 0.0, %v877
  %v942 = vsub.f32 0.0, %v878
  %v943 = vsub.f32 0.0, %v879
  %v944 = vsub.f32 0.0, %v880
  %v945 = vsub.f32 0.0, %v881
  %v946 = vsub.f32 0.0, %v882
  %v947 = vsub.f32 0.0, %v883
  %v948 = vsub.f32 0.0, %v884
  %v949 = vsub.f32 0.0, %v885
  %v950 = vsub.f32 0.0, %v886
  %v951 = vsub.f32 0.0, %v887
  %v952 = vsub.f32 0.0, %v888
  %v953 = vsub.f32 0.0, %v889
  %v954 = vsub.f32 0.0, %v890
  %v955 = vsub.f32 0.0, %v891
  %v956 = vsub.f32 0.0, %v892
  %v957 = vsub.f32 0.0, %v893
  %v958 = vsub.f32 0.0, %v894
  %v959 = vsub.f32 0.0, %v895
  %v960 = vsub.f32 0.0, %v896
  %v961 = vsub.f32 0.0, %v897
  %v962 = vsub.f32 0.0, %v898
  %v963 = vsub.f32 0.0, %v899
  %v964 = vsub.f32 0.0, %v900
  %v965 = vsub.f32 0.0, %v901
  %v966 = vsub.f32 0.0, %v902
  %v967 = vsub.f32 0.0, %v903
  %v968 = vsub.f32 0.0, %v904
  %v969 = vsub.f32 0.0, %v905
  %v970 = vsub.f32 0.0, %v906
  %v971 = vsub.f32 0.0, %v907
  %v972 = vsub.f32 0.0, %v908
  %v973 = vsub.f32 0.0, %v909
  %v974 = vsub.f32 0.0, %v910
  %v975 = vsub.f32 0.0, %v911
  %v976 = vsub.f32 0.0, %v912
  %v977 = vsub.f32 0.0, %v913
  %v978 = vsub.f32 0.0, %v914
  %v979 = vsub.f32 0.0, %v915
  %v980 = vsub.f32 0.0, %v916
  %v981 = vsub.f32 0.0, %v917
  %v982 = vsub.f32 0.0, %v918
  %v983 = vsub.f32 0.0, %v919
  %v984 = vsub.f32 0.0, %v920
  %v985 = vsub.f32 0.0, %v921
  %v986 = vsub.f32 0.0, %v922
  %v987 = vsub.f32 0.0, %v923
  %v988 = vsub.f32 0.0, %v924
  %v989 = vsub.f32 0.0, %v925
  %v990 = vmul.f32 %v926, 1.442695
  %v991 = vpow.pop %v990
  %v992 = vmul.f32 %v927, 1.442695
  %v993 = vpow.pop %v992
  %v994 = vmul.f32 %v928, 1.442695
  %v995 = vpow.pop %v994
  %v996 = vmul.f32 %v929, 1.442695
  %v997 = vpow.pop %v996
  %v998 = vmul.f32 %v930, 1.442695
  %v999 = vpow.pop %v998
  %v1000 = vmul.f32 %v931, 1.442695
  %v1001 = vpow.pop %v1000
  %v1002 = vmul.f32 %v932, 1.442695
  %v1003 = vpow.pop %v1002
  %v1004 = vmul.f32 %v933, 1.442695
  %v1005 = vpow.pop %v1004
  %v1006 = vmul.f32 %v934, 1.442695
  %v1007 = vpow.pop %v1006
  %v1008 = vmul.f32 %v935, 1.442695
  %v1009 = vpow.pop %v1008
  %v1010 = vmul.f32 %v936, 1.442695
  %v1011 = vpow.pop %v1010
  %v1012 = vmul.f32 %v937, 1.442695
  %v1013 = vpow.pop %v1012
  %v1014 = vmul.f32 %v938, 1.442695
  %v1015 = vpow.pop %v1014
  %v1016 = vmul.f32 %v939, 1.442695
  %v1017 = vpow.pop %v1016
  %v1018 = vmul.f32 %v940, 1.442695
  %v1019 = vpow.pop %v1018
  %v1020 = vmul.f32 %v941, 1.442695
  %v1021 = vpow.pop %v1020
  %v1022 = vmul.f32 %v942, 1.442695
  %v1023 = vpow.pop %v1022
  %v1024 = vmul.f32 %v943, 1.442695
  %v1025 = vpow.pop %v1024
  %v1026 = vmul.f32 %v944, 1.442695
  %v1027 = vpow.pop %v1026
  %v1028 = vmul.f32 %v945, 1.442695
  %v1029 = vpow.pop %v1028
  %v1030 = vmul.f32 %v946, 1.442695
  %v1031 = vpow.pop %v1030
  %v1032 = vmul.f32 %v947, 1.442695
  %v1033 = vpow.pop %v1032
  %v1034 = vmul.f32 %v948, 1.442695
  %v1035 = vpow.pop %v1034
  %v1036 = vmul.f32 %v949, 1.442695
  %v1037 = vpow.pop %v1036
  %v1038 = vmul.f32 %v950, 1.442695
  %v1039 = vpow.pop %v1038
  %v1040 = vmul.f32 %v951, 1.442695
  %v1041 = vpow.pop %v1040
  %v1042 = vmul.f32 %v952, 1.442695
  %v1043 = vpow.pop %v1042
  %v1044 = vmul.f32 %v953, 1.442695
  %v1045 = vpow.pop %v1044
  %v1046 = vmul.f32 %v954, 1.442695
  %v1047 = vpow.pop %v1046
  %v1048 = vmul.f32 %v955, 1.442695
  %v1049 = vpow.pop %v1048
  %v1050 = vmul.f32 %v956, 1.442695
  %v1051 = vpow.pop %v1050
  %v1052 = vmul.f32 %v957, 1.442695
  %v1053 = vpow.pop %v1052
  %v1054 = vmul.f32 %v958, 1.442695
  %v1055 = vpow.pop %v1054
  %v1056 = vmul.f32 %v959, 1.442695
  %v1057 = vpow.pop %v1056
  %v1058 = vmul.f32 %v960, 1.442695
  %v1059 = vpow.pop %v1058
  %v1060 = vmul.f32 %v961, 1.442695
  %v1061 = vpow.pop %v1060
  %v1062 = vmul.f32 %v962, 1.442695
  %v1063 = vpow.pop %v1062
  %v1064 = vmul.f32 %v963, 1.442695
  %v1065 = vpow.pop %v1064
  %v1066 = vmul.f32 %v964, 1.442695
  %v1067 = vpow.pop %v1066
  %v1068 = vmul.f32 %v965, 1.442695
  %v1069 = vpow.pop %v1068
  %v1070 = vmul.f32 %v966, 1.442695
  %v1071 = vpow.pop %v1070
  %v1072 = vmul.f32 %v967, 1.442695
  %v1073 = vpow.pop %v1072
  %v1074 = vmul.f32 %v968, 1.442695
  %v1075 = vpow.pop %v1074
  %v1076 = vmul.f32 %v969, 1.442695
  %v1077 = vpow.pop %v1076
  %v1078 = vmul.f32 %v970, 1.442695
  %v1079 = vpow.pop %v1078
  %v1080 = vmul.f32 %v971, 1.442695
  %v1081 = vpow.pop %v1080
  %v1082 = vmul.f32 %v972, 1.442695
  %v1083 = vpow.pop %v1082
  %v1084 = vmul.f32 %v973, 1.442695
  %v1085 = vpow.pop %v1084
  %v1086 = vmul.f32 %v974, 1.442695
  %v1087 = vpow.pop %v1086
  %v1088 = vmul.f32 %v975, 1.442695
  %v1089 = vpow.pop %v1088
  %v1090 = vmul.f32 %v976, 1.442695
  %v1091 = vpow.pop %v1090
  %v1092 = vmul.f32 %v977, 1.442695
  %v1093 = vpow.pop %v1092
  %v1094 = vmul.f32 %v978, 1.442695
  %v1095 = vpow.pop %v1094
  %v1096 = vmul.f32 %v979, 1.442695
  %v1097 = vpow.pop %v1096
  %v1098 = vmul.f32 %v980, 1.442695
  %v1099 = vpow.pop %v1098
  %v1100 = vmul.f32 %v981, 1.442695
  %v1101 = vpow.pop %v1100
  %v1102 = vmul.f32 %v982, 1.442695
  %v1103 = vpow.pop %v1102
  %v1104 = vmul.f32 %v983, 1.442695
  %v1105 = vpow.pop %v1104
  %v1106 = vmul.f32 %v984, 1.442695
  %v1107 = vpow.pop %v1106
  %v1108 = vmul.f32 %v985, 1.442695
  %v1109 = vpow.pop %v1108
  %v1110 = vmul.f32 %v986, 1.442695
  %v1111 = vpow.pop %v1110
  %v1112 = vmul.f32 %v987, 1.442695
  %v1113 = vpow.pop %v1112
  %v1114 = vmul.f32 %v988, 1.442695
  %v1115 = vpow.pop %v1114
  %v1116 = vmul.f32 %v989, 1.442695
  %v1117 = vpow.pop %v1116
  %v1118 = vadd.f32 %v991, 1.0
  %v1119 = vadd.f32 %v993, 1.0
  %v1120 = vadd.f32 %v995, 1.0
  %v1121 = vadd.f32 %v997, 1.0
  %v1122 = vadd.f32 %v999, 1.0
  %v1123 = vadd.f32 %v1001, 1.0
  %v1124 = vadd.f32 %v1003, 1.0
  %v1125 = vadd.f32 %v1005, 1.0
  %v1126 = vadd.f32 %v1007, 1.0
  %v1127 = vadd.f32 %v1009, 1.0
  %v1128 = vadd.f32 %v1011, 1.0
  %v1129 = vadd.f32 %v1013, 1.0
  %v1130 = vadd.f32 %v1015, 1.0
  %v1131 = vadd.f32 %v1017, 1.0
  %v1132 = vadd.f32 %v1019, 1.0
  %v1133 = vadd.f32 %v1021, 1.0
  %v1134 = vadd.f32 %v1023, 1.0
  %v1135 = vadd.f32 %v1025, 1.0
  %v1136 = vadd.f32 %v1027, 1.0
  %v1137 = vadd.f32 %v1029, 1.0
  %v1138 = vadd.f32 %v1031, 1.0
  %v1139 = vadd.f32 %v1033, 1.0
  %v1140 = vadd.f32 %v1035, 1.0
  %v1141 = vadd.f32 %v1037, 1.0
  %v1142 = vadd.f32 %v1039, 1.0
  %v1143 = vadd.f32 %v1041, 1.0
  %v1144 = vadd.f32 %v1043, 1.0
  %v1145 = vadd.f32 %v1045, 1.0
  %v1146 = vadd.f32 %v1047, 1.0
  %v1147 = vadd.f32 %v1049, 1.0
  %v1148 = vadd.f32 %v1051, 1.0
  %v1149 = vadd.f32 %v1053, 1.0
  %v1150 = vadd.f32 %v1055, 1.0
  %v1151 = vadd.f32 %v1057, 1.0
  %v1152 = vadd.f32 %v1059, 1.0
  %v1153 = vadd.f32 %v1061, 1.0
  %v1154 = vadd.f32 %v1063, 1.0
  %v1155 = vadd.f32 %v1065, 1.0
  %v1156 = vadd.f32 %v1067, 1.0
  %v1157 = vadd.f32 %v1069, 1.0
  %v1158 = vadd.f32 %v1071, 1.0
  %v1159 = vadd.f32 %v1073, 1.0
  %v1160 = vadd.f32 %v1075, 1.0
  %v1161 = vadd.f32 %v1077, 1.0
  %v1162 = vadd.f32 %v1079, 1.0
  %v1163 = vadd.f32 %v1081, 1.0
  %v1164 = vadd.f32 %v1083, 1.0
  %v1165 = vadd.f32 %v1085, 1.0
  %v1166 = vadd.f32 %v1087, 1.0
  %v1167 = vadd.f32 %v1089, 1.0
  %v1168 = vadd.f32 %v1091, 1.0
  %v1169 = vadd.f32 %v1093, 1.0
  %v1170 = vadd.f32 %v1095, 1.0
  %v1171 = vadd.f32 %v1097, 1.0
  %v1172 = vadd.f32 %v1099, 1.0
  %v1173 = vadd.f32 %v1101, 1.0
  %v1174 = vadd.f32 %v1103, 1.0
  %v1175 = vadd.f32 %v1105, 1.0
  %v1176 = vadd.f32 %v1107, 1.0
  %v1177 = vadd.f32 %v1109, 1.0
  %v1178 = vadd.f32 %v1111, 1.0
  %v1179 = vadd.f32 %v1113, 1.0
  %v1180 = vadd.f32 %v1115, 1.0
  %v1181 = vadd.f32 %v1117, 1.0
  %v1182 = vrcp.pop %v1118
  %v1183 = vrcp.pop %v1119
  %v1184 = vrcp.pop %v1120
  %v1185 = vrcp.pop %v1121
  %v1186 = vrcp.pop %v1122
  %v1187 = vrcp.pop %v1123
  %v1188 = vrcp.pop %v1124
  %v1189 = vrcp.pop %v1125
  %v1190 = vrcp.pop %v1126
  %v1191 = vrcp.pop %v1127
  %v1192 = vrcp.pop %v1128
  %v1193 = vrcp.pop %v1129
  %v1194 = vrcp.pop %v1130
  %v1195 = vrcp.pop %v1131
  %v1196 = vrcp.pop %v1132
  %v1197 = vrcp.pop %v1133
  %v1198 = vrcp.pop %v1134
  %v1199 = vrcp.pop %v1135
  %v1200 = vrcp.pop %v1136
  %v1201 = vrcp.pop %v1137
  %v1202 = vrcp.pop %v1138
  %v1203 = vrcp.pop %v1139
  %v1204 = vrcp.pop %v1140
  %v1205 = vrcp.pop %v1141
  %v1206 = vrcp.pop %v1142
  %v1207 = vrcp.pop %v1143
  %v1208 = vrcp.pop %v1144
  %v1209 = vrcp.pop %v1145
  %v1210 = vrcp.pop %v1146
  %v1211 = vrcp.pop %v1147
  %v1212 = vrcp.pop %v1148
  %v1213 = vrcp.pop %v1149
  %v1214 = vrcp.pop %v1150
  %v1215 = vrcp.pop %v1151
  %v1216 = vrcp.pop %v1152
  %v1217 = vrcp.pop %v1153
  %v1218 = vrcp.pop %v1154
  %v1219 = vrcp.pop %v1155
  %v1220 = vrcp.pop %v1156
  %v1221 = vrcp.pop %v1157
  %v1222 = vrcp.pop %v1158
  %v1223 = vrcp.pop %v1159
  %v1224 = vrcp.pop %v1160
  %v1225 = vrcp.pop %v1161
  %v1226 = vrcp.pop %v1162
  %v1227 = vrcp.pop %v1163
  %v1228 = vrcp.pop %v1164
  %v1229 = vrcp.pop %v1165
  %v1230 = vrcp.pop %v1166
  %v1231 = vrcp.pop %v1167
  %v1232 = vrcp.pop %v1168
  %v1233 = vrcp.pop %v1169
  %v1234 = vrcp.pop %v1170
  %v1235 = vrcp.pop %v1171
  %v1236 = vrcp.pop %v1172
  %v1237 = vrcp.pop %v1173
  %v1238 = vrcp.pop %v1174
  %v1239 = vrcp.pop %v1175
  %v1240 = vrcp.pop %v1176
  %v1241 = vrcp.pop %v1177
  %v1242 = vrcp.pop %v1178
  %v1243 = vrcp.pop %v1179
  %v1244 = vrcp.pop %v1180
  %v1245 = vrcp.pop %v1181
  %vm1246 = vcmask 7168
  %1247 = vst.msk [vmem:[%s5] sm:$0xff] %vm1246, %v1182
  %1248 = vst.msk [vmem:[%s5 + $0x8] sm:$0xff] %vm1246, %v1183
  %1249 = vst.msk [vmem:[%s5 + $0x10] sm:$0xff] %vm1246, %v1184
  %1250 = vst.msk [vmem:[%s5 + $0x18] sm:$0xff] %vm1246, %v1185
  %1251 = vst.msk [vmem:[%s5 + $0x20] sm:$0xff] %vm1246, %v1186
  %1252 = vst.msk [vmem:[%s5 + $0x28] sm:$0xff] %vm1246, %v1187
  %1253 = vst.msk [vmem:[%s5 + $0x30] sm:$0xff] %vm1246, %v1188
  %1254 = vst.msk [vmem:[%s5 + $0x38] sm:$0xff] %vm1246, %v1189
  %1255 = vst.msk [vmem:[%s5 + $0x40] sm:$0xff] %vm1246, %v1190
  %1256 = vst.msk [vmem:[%s5 + $0x48] sm:$0xff] %vm1246, %v1191
  %1257 = vst.msk [vmem:[%s5 + $0x50] sm:$0xff] %vm1246, %v1192
  %1258 = vst.msk [vmem:[%s5 + $0x58] sm:$0xff] %vm1246, %v1193
  %1259 = vst.msk [vmem:[%s5 + $0x60] sm:$0xff] %vm1246, %v1194
  %1260 = vst.msk [vmem:[%s5 + $0x68] sm:$0xff] %vm1246, %v1195
  %1261 = vst.msk [vmem:[%s5 + $0x70] sm:$0xff] %vm1246, %v1196
  %1262 = vst.msk [vmem:[%s5 + $0x78] sm:$0xff] %vm1246, %v1197
  %1263 = vst.msk [vmem:[%s5 + $0x80] sm:$0xff] %vm1246, %v1198
  %1264 = vst.msk [vmem:[%s5 + $0x88] sm:$0xff] %vm1246, %v1199
  %1265 = vst.msk [vmem:[%s5 + $0x90] sm:$0xff] %vm1246, %v1200
  %1266 = vst.msk [vmem:[%s5 + $0x98] sm:$0xff] %vm1246, %v1201
  %1267 = vst.msk [vmem:[%s5 + $0xa0] sm:$0xff] %vm1246, %v1202
  %1268 = vst.msk [vmem:[%s5 + $0xa8] sm:$0xff] %vm1246, %v1203
  %1269 = vst.msk [vmem:[%s5 + $0xb0] sm:$0xff] %vm1246, %v1204
  %1270 = vst.msk [vmem:[%s5 + $0xb8] sm:$0xff] %vm1246, %v1205
  %1271 = vst.msk [vmem:[%s5 + $0xc0] sm:$0xff] %vm1246, %v1206
  %1272 = vst.msk [vmem:[%s5 + $0xc8] sm:$0xff] %vm1246, %v1207
  %1273 = vst.msk [vmem:[%s5 + $0xd0] sm:$0xff] %vm1246, %v1208
  %1274 = vst.msk [vmem:[%s5 + $0xd8] sm:$0xff] %vm1246, %v1209
  %1275 = vst.msk [vmem:[%s5 + $0xe0] sm:$0xff] %vm1246, %v1210
  %1276 = vst.msk [vmem:[%s5 + $0xe8] sm:$0xff] %vm1246, %v1211
  %1277 = vst.msk [vmem:[%s5 + $0xf0] sm:$0xff] %vm1246, %v1212
  %1278 = vst.msk [vmem:[%s5 + $0xf8] sm:$0xff] %vm1246, %v1213
  %1279 = vst.msk [vmem:[%s5 + $0x100] sm:$0xff] %vm1246, %v1214
  %1280 = vst.msk [vmem:[%s5 + $0x108] sm:$0xff] %vm1246, %v1215
  %1281 = vst.msk [vmem:[%s5 + $0x110] sm:$0xff] %vm1246, %v1216
  %1282 = vst.msk [vmem:[%s5 + $0x118] sm:$0xff] %vm1246, %v1217
  %1283 = vst.msk [vmem:[%s5 + $0x120] sm:$0xff] %vm1246, %v1218
  %1284 = vst.msk [vmem:[%s5 + $0x128] sm:$0xff] %vm1246, %v1219
  %1285 = vst.msk [vmem:[%s5 + $0x130] sm:$0xff] %vm1246, %v1220
  %1286 = vst.msk [vmem:[%s5 + $0x138] sm:$0xff] %vm1246, %v1221
  %1287 = vst.msk [vmem:[%s5 + $0x140] sm:$0xff] %vm1246, %v1222
  %1288 = vst.msk [vmem:[%s5 + $0x148] sm:$0xff] %vm1246, %v1223
  %1289 = vst.msk [vmem:[%s5 + $0x150] sm:$0xff] %vm1246, %v1224
  %1290 = vst.msk [vmem:[%s5 + $0x158] sm:$0xff] %vm1246, %v1225
  %1291 = vst.msk [vmem:[%s5 + $0x160] sm:$0xff] %vm1246, %v1226
  %1292 = vst.msk [vmem:[%s5 + $0x168] sm:$0xff] %vm1246, %v1227
  %1293 = vst.msk [vmem:[%s5 + $0x170] sm:$0xff] %vm1246, %v1228
  %1294 = vst.msk [vmem:[%s5 + $0x178] sm:$0xff] %vm1246, %v1229
  %1295 = vst.msk [vmem:[%s5 + $0x180] sm:$0xff] %vm1246, %v1230
  %1296 = vst.msk [vmem:[%s5 + $0x188] sm:$0xff] %vm1246, %v1231
  %1297 = vst.msk [vmem:[%s5 + $0x190] sm:$0xff] %vm1246, %v1232
  %1298 = vst.msk [vmem:[%s5 + $0x198] sm:$0xff] %vm1246, %v1233
  %1299 = vst.msk [vmem:[%s5 + $0x1a0] sm:$0xff] %vm1246, %v1234
  %1300 = vst.msk [vmem:[%s5 + $0x1a8] sm:$0xff] %vm1246, %v1235
  %1301 = vst.msk [vmem:[%s5 + $0x1b0] sm:$0xff] %vm1246, %v1236
  %1302 = vst.msk [vmem:[%s5 + $0x1b8] sm:$0xff] %vm1246, %v1237
  %1303 = vst.msk [vmem:[%s5 + $0x1c0] sm:$0xff] %vm1246, %v1238
  %1304 = vst.msk [vmem:[%s5 + $0x1c8] sm:$0xff] %vm1246, %v1239
  %1305 = vst.msk [vmem:[%s5 + $0x1d0] sm:$0xff] %vm1246, %v1240
  %1306 = vst.msk [vmem:[%s5 + $0x1d8] sm:$0xff] %vm1246, %v1241
  %1307 = vst.msk [vmem:[%s5 + $0x1e0] sm:$0xff] %vm1246, %v1242
  %1308 = vst.msk [vmem:[%s5 + $0x1e8] sm:$0xff] %vm1246, %v1243
  %1309 = vst.msk [vmem:[%s5 + $0x1f0] sm:$0xff] %vm1246, %v1244
  %1310 = vst.msk [vmem:[%s5 + $0x1f8] sm:$0xff] %vm1246, %v1245
  // Predicated region
  $region22: #{classification_layer.1} parent=0 // pred_check
    _
  $region23: #{classification_layer.1} parent=0 // pred_check_branch
    %1312 = sbr.rel (0) target = $region25
  $region24: #{classification_layer.1} parent=0 // pred_region
    _
  $region25: #{classification_layer.1} parent=0 // pred_fallthru
    _
  // Predicated region
  $region26: #{classification_layer.1} parent=0 // pred_check
    _
  $region27: #{classification_layer.1} parent=0 // pred_check_branch
    %1314 = sbr.rel (0) target = $region29
  $region28: #{classification_layer.1} parent=0 // pred_region
    _
  $region29: #{classification_layer.1} parent=0 // pred_fallthru
    _

</llo_original>
